<compile_context>
chip_gen: v7x
topology: tpu7x:2x2x1
jax: 0.10.0
libtpu: 0.0.40
codegen_flags: <defaults>
</compile_context>

<pallas_src>
import numpy as np
import jax
import jax.numpy as jnp
from jax.experimental import pallas as pl
from jax.experimental.pallas import tpu as pltpu


def _make_kernel(K1, K2, R1, R2):
    def kernel(xs_ref, w1_ref, b1_ref, w2_ref, b2_ref, out_ref):
        xs = xs_ref[...]                                        # (N*H, W*Cin)

        # ---- layer 1: Conv2d(Cin -> Cmid, K1, VALID) + ReLU ----
        # kw/ci folded into the banded weight; accumulate kh taps in registers,
        # initialize with the broadcast bias (no zero fill, no separate bias pass).
        acc1 = b1_ref[...] + jnp.dot(xs[0:R1, :], w1_ref[0],
                                     preferred_element_type=jnp.float32)
        for kh in range(1, K1):
            acc1 = acc1 + jnp.dot(xs[kh:kh + R1, :], w1_ref[kh],
                                  preferred_element_type=jnp.float32)
        h1 = jnp.maximum(acc1, 0.0)                             # (R1, OW1*Cmid) in vregs

        # ---- layer 2: Conv2d(Cmid -> Cout, K2, VALID) + ReLU ----
        acc2 = b2_ref[...] + jnp.dot(h1[0:R2, :], w2_ref[0],
                                     preferred_element_type=jnp.float32)
        for kh in range(1, K2):
            acc2 = acc2 + jnp.dot(h1[kh:kh + R2, :], w2_ref[kh],
                                  preferred_element_type=jnp.float32)

        out_ref[...] = jnp.maximum(acc2, 0.0)                   # single lane-dense store

    return kernel


def _banded_weight(w, in_w, out_w):
    """torch Conv2d weight (Cout, Cin, K, K) -> (K, in_w*Cin, out_w*Cout) banded matrices.

    band[kh][(ow+kw)*Cin + ci, ow*Cout + co] = w[co, ci, kh, kw]
    so for each kh tap a single matmul handles all kw taps and all channels.
    """
    w = np.asarray(w, np.float32)
    cout, cin, K, _ = w.shape
    wt = np.transpose(w, (2, 3, 1, 0))                          # (kh, kw, cin, cout)
    band = np.zeros((K, in_w * cin, out_w * cout), np.float32)
    for kh in range(K):
        for kw in range(K):
            blk = wt[kh, kw]                                    # (cin, cout)
            for ow in range(out_w):
                iw = ow + kw
                band[kh, iw * cin:(iw + 1) * cin, ow * cout:(ow + 1) * cout] = blk
    return jnp.asarray(band)


def prepare_unet_block(w1, b1, w2, b2, H, W):
    """One-time host-side parameter massaging (hoisted out of the forward path)."""
    w1 = np.asarray(w1, np.float32)
    w2 = np.asarray(w2, np.float32)
    cmid, cin, K1, _ = w1.shape
    cout, _, K2, _ = w2.shape
    OH1, OW1 = H - K1 + 1, W - K1 + 1
    OH2, OW2 = OH1 - K2 + 1, OW1 - K2 + 1
    return dict(
        w1b=_banded_weight(w1, W, OW1),                         # (K1, W*Cin,   OW1*Cmid)
        w2b=_banded_weight(w2, OW1, OW2),                       # (K2, OW1*Cmid, OW2*Cout)
        b1r=jnp.asarray(np.tile(np.asarray(b1, np.float32), OW1)[None, :]),   # (1, OW1*Cmid)
        b2r=jnp.asarray(np.tile(np.asarray(b2, np.float32), OW2)[None, :]),   # (1, OW2*Cout)
        cin=cin, cmid=cmid, cout=cout, K1=K1, K2=K2,
        H=H, W=W, OH1=OH1, OW1=OW1, OH2=OH2, OW2=OW2,
    )


def unet_block_forward(x_nchw, p):
    """relu(conv2(relu(conv1(x)))) with 3x3 VALID convs, via one Pallas TPU kernel."""
    N, cin, H, W = x_nchw.shape
    assert cin == p["cin"] and H == p["H"] and W == p["W"]
    K1, K2 = p["K1"], p["K2"]
    OW1, OH2, OW2 = p["OW1"], p["OH2"], p["OW2"]
    cmid, cout = p["cmid"], p["cout"]

    NH = N * H
    R1 = NH - (K1 - 1)                 # layer-1 rows (valid rows per image + boundary junk)
    R2 = R1 - (K2 - 1)                 # layer-2 rows

    # Layout plumbing only: NCHW -> channels-last, batch+height stacked on the sublane axis.
    xs = jnp.transpose(x_nchw, (0, 2, 3, 1)).astype(jnp.float32).reshape(NH, W * cin)

    flops = 2 * (K1 * R1 * (W * cin) * (OW1 * cmid) +
                 K2 * R2 * (OW1 * cmid) * (OW2 * cout))
    bytes_accessed = 4 * (xs.size + p["w1b"].size + p["b1r"].size +
                          p["w2b"].size + p["b2r"].size + R2 * OW2 * cout)

    out2d = pl.pallas_call(
        _make_kernel(K1, K2, R1, R2),
        out_shape=jax.ShapeDtypeStruct((R2, OW2 * cout), jnp.float32),
        grid=(1,),
        in_specs=[
            pl.BlockSpec((NH, W * cin), lambda i: (0, 0)),
            pl.BlockSpec((K1, W * cin, OW1 * cmid), lambda i: (0, 0, 0)),
            pl.BlockSpec((1, OW1 * cmid), lambda i: (0, 0)),
            pl.BlockSpec((K2, OW1 * cmid, OW2 * cout), lambda i: (0, 0, 0)),
            pl.BlockSpec((1, OW2 * cout), lambda i: (0, 0)),
        ],
        out_specs=pl.BlockSpec((R2, OW2 * cout), lambda i: (0, 0)),
        compiler_params=pltpu.CompilerParams(dimension_semantics=("parallel",)),
        cost_estimate=pl.CostEstimate(flops=flops, transcendentals=0,
                                      bytes_accessed=bytes_accessed),
    )(xs, p["w1b"], p["b1r"], p["w2b"], p["b2r"])

    # Valid output rows of image n live at stacked rows [n*H, n*H + OH2); the rest is
    # image-boundary junk that layer 2 provably never consumed.
    out_rows = jnp.stack([out2d[n * H:n * H + OH2] for n in range(N)])   # (N, OH2, OW2*Cout)
    out_nhwc = out_rows.reshape(N, OH2, OW2, cout)
    return jnp.transpose(out_nhwc, (0, 3, 1, 2))                         # NCHW


def _ref_forward(x, w1, b1, w2, b2):
    """Pure-JAX reference of the PyTorch UNet_Block forward."""
    dn = ('NCHW', 'OIHW', 'NCHW')
    h = jax.lax.conv_general_dilated(x, w1, (1, 1), 'VALID', dimension_numbers=dn)
    h = jnp.maximum(h + b1[None, :, None, None], 0.0)
    o = jax.lax.conv_general_dilated(h, w2, (1, 1), 'VALID', dimension_numbers=dn)
    return jnp.maximum(o + b2[None, :, None, None], 0.0)


if __name__ == "__main__":
    N, IN_CH, OUT_CH = 2, 4, 8
    H = W = 16

    key = jax.random.PRNGKey(0)
    kx, k1, k2, k3, k4 = jax.random.split(key, 5)
    x = jax.random.normal(kx, (N, IN_CH, H, W), jnp.float32)
    w1 = jax.random.normal(k1, (OUT_CH, IN_CH, 3, 3), jnp.float32) * 0.2
    b1 = jax.random.normal(k2, (OUT_CH,), jnp.float32) * 0.1
    w2 = jax.random.normal(k3, (OUT_CH, OUT_CH, 3, 3), jnp.float32) * 0.2
    b2 = jax.random.normal(k4, (OUT_CH,), jnp.float32) * 0.1

    params = prepare_unet_block(w1, b1, w2, b2, H, W)   # one-time prep (off the hot path)
    out = unet_block_forward(x, params)
    out = jax.block_until_ready(out)

    ref = _ref_forward(x, w1, b1, w2, b2)
    assert out.shape == ref.shape == (N, OUT_CH, H - 4, W - 4)
    np.testing.assert_allclose(np.asarray(out), np.asarray(ref), atol=1e-4, rtol=1e-4)
    print("KERNEL_OK")
</pallas_src>

<mosaic_0001>
module attributes {stable_mosaic.version = 11 : i64} {
  func.func @kernel(%arg0: i32, %arg1: memref<32x64xf32, #tpu.memory_space<vmem>>, %arg2: memref<3x64x112xf32, #tpu.memory_space<vmem>>, %arg3: memref<1x112xf32, #tpu.memory_space<vmem>>, %arg4: memref<3x112x96xf32, #tpu.memory_space<vmem>>, %arg5: memref<1x96xf32, #tpu.memory_space<vmem>>, %arg6: memref<28x96xf32, #tpu.memory_space<vmem>>) attributes {dimension_semantics = [#tpu.dimension_semantics<parallel>], iteration_bounds = array<i64: 1>, scalar_prefetch = 0 : i64, scratch_operands = 0 : i64, tpu.core_type = #tpu.core_type<tc>, window_params = [{pipeline_mode = #tpu.pipeline_mode<synchronous>, transform_indices = @transform_0, window_bounds = array<i64: 32, 64>}, {pipeline_mode = #tpu.pipeline_mode<synchronous>, transform_indices = @transform_1, window_bounds = array<i64: 3, 64, 112>}, {pipeline_mode = #tpu.pipeline_mode<synchronous>, transform_indices = @transform_2, window_bounds = array<i64: 1, 112>}, {pipeline_mode = #tpu.pipeline_mode<synchronous>, transform_indices = @transform_3, window_bounds = array<i64: 3, 112, 96>}, {pipeline_mode = #tpu.pipeline_mode<synchronous>, transform_indices = @transform_4, window_bounds = array<i64: 1, 96>}, {pipeline_mode = #tpu.pipeline_mode<synchronous>, transform_indices = @transform_5, window_bounds = array<i64: 28, 96>}]} {
    %c0 = arith.constant 0 : index
    %c0_0 = arith.constant 0 : index
    %0 = vector.load %arg1[%c0, %c0_0] : memref<32x64xf32, #tpu.memory_space<vmem>>, vector<32x64xf32>
    %c0_1 = arith.constant 0 : index
    %c0_2 = arith.constant 0 : index
    %1 = vector.load %arg3[%c0_1, %c0_2] : memref<1x112xf32, #tpu.memory_space<vmem>>, vector<1x112xf32>
    %2 = vector.extract_strided_slice %0 {offsets = [0, 0], sizes = [30, 64], strides = [1, 1]} : vector<32x64xf32> to vector<30x64xf32>
    %c0_3 = arith.constant 0 : index
    %c0_4 = arith.constant 0 : index
    %c0_5 = arith.constant 0 : index
    %3 = vector.load %arg2[%c0_3, %c0_4, %c0_5] : memref<3x64x112xf32, #tpu.memory_space<vmem>>, vector<1x64x112xf32>
    %4 = vector.shape_cast %3 : vector<1x64x112xf32> to vector<64x112xf32>
    %cst = arith.constant dense<0.000000e+00> : vector<30x112xf32>
    %5 = tpu.matmul %2, %4, %cst {dimension_numbers = #tpu.dot_dimension_numbers<[1], [0], [0], [1], [0, 0, 1, 1], [], []>} : vector<30x64xf32>, vector<64x112xf32>, vector<30x112xf32> -> vector<30x112xf32>
    %6 = vector.broadcast %1 : vector<1x112xf32> to vector<30x112xf32>
    %7 = arith.addf %6, %5 : vector<30x112xf32>
    %8 = vector.extract_strided_slice %0 {offsets = [1, 0], sizes = [30, 64], strides = [1, 1]} : vector<32x64xf32> to vector<30x64xf32>
    %c1 = arith.constant 1 : index
    %c0_6 = arith.constant 0 : index
    %c0_7 = arith.constant 0 : index
    %9 = vector.load %arg2[%c1, %c0_6, %c0_7] : memref<3x64x112xf32, #tpu.memory_space<vmem>>, vector<1x64x112xf32>
    %10 = vector.shape_cast %9 : vector<1x64x112xf32> to vector<64x112xf32>
    %cst_8 = arith.constant dense<0.000000e+00> : vector<30x112xf32>
    %11 = tpu.matmul %8, %10, %cst_8 {dimension_numbers = #tpu.dot_dimension_numbers<[1], [0], [0], [1], [0, 0, 1, 1], [], []>} : vector<30x64xf32>, vector<64x112xf32>, vector<30x112xf32> -> vector<30x112xf32>
    %12 = arith.addf %7, %11 : vector<30x112xf32>
    %13 = vector.extract_strided_slice %0 {offsets = [2, 0], sizes = [30, 64], strides = [1, 1]} : vector<32x64xf32> to vector<30x64xf32>
    %c2 = arith.constant 2 : index
    %c0_9 = arith.constant 0 : index
    %c0_10 = arith.constant 0 : index
    %14 = vector.load %arg2[%c2, %c0_9, %c0_10] : memref<3x64x112xf32, #tpu.memory_space<vmem>>, vector<1x64x112xf32>
    %15 = vector.shape_cast %14 : vector<1x64x112xf32> to vector<64x112xf32>
    %cst_11 = arith.constant dense<0.000000e+00> : vector<30x112xf32>
    %16 = tpu.matmul %13, %15, %cst_11 {dimension_numbers = #tpu.dot_dimension_numbers<[1], [0], [0], [1], [0, 0, 1, 1], [], []>} : vector<30x64xf32>, vector<64x112xf32>, vector<30x112xf32> -> vector<30x112xf32>
    %17 = arith.addf %12, %16 : vector<30x112xf32>
    %cst_12 = arith.constant 0.000000e+00 : f32
    %18 = vector.broadcast %cst_12 : f32 to vector<30x112xf32>
    %19 = arith.maximumf %17, %18 : vector<30x112xf32>
    %c0_13 = arith.constant 0 : index
    %c0_14 = arith.constant 0 : index
    %20 = vector.load %arg5[%c0_13, %c0_14] : memref<1x96xf32, #tpu.memory_space<vmem>>, vector<1x96xf32>
    %21 = vector.extract_strided_slice %19 {offsets = [0, 0], sizes = [28, 112], strides = [1, 1]} : vector<30x112xf32> to vector<28x112xf32>
    %c0_15 = arith.constant 0 : index
    %c0_16 = arith.constant 0 : index
    %c0_17 = arith.constant 0 : index
    %22 = vector.load %arg4[%c0_15, %c0_16, %c0_17] : memref<3x112x96xf32, #tpu.memory_space<vmem>>, vector<1x112x96xf32>
    %23 = vector.shape_cast %22 : vector<1x112x96xf32> to vector<112x96xf32>
    %cst_18 = arith.constant dense<0.000000e+00> : vector<28x96xf32>
    %24 = tpu.matmul %21, %23, %cst_18 {dimension_numbers = #tpu.dot_dimension_numbers<[1], [0], [0], [1], [0, 0, 1, 1], [], []>} : vector<28x112xf32>, vector<112x96xf32>, vector<28x96xf32> -> vector<28x96xf32>
    %25 = vector.broadcast %20 : vector<1x96xf32> to vector<28x96xf32>
    %26 = arith.addf %25, %24 : vector<28x96xf32>
    %27 = vector.extract_strided_slice %19 {offsets = [1, 0], sizes = [28, 112], strides = [1, 1]} : vector<30x112xf32> to vector<28x112xf32>
    %c1_19 = arith.constant 1 : index
    %c0_20 = arith.constant 0 : index
    %c0_21 = arith.constant 0 : index
    %28 = vector.load %arg4[%c1_19, %c0_20, %c0_21] : memref<3x112x96xf32, #tpu.memory_space<vmem>>, vector<1x112x96xf32>
    %29 = vector.shape_cast %28 : vector<1x112x96xf32> to vector<112x96xf32>
    %cst_22 = arith.constant dense<0.000000e+00> : vector<28x96xf32>
    %30 = tpu.matmul %27, %29, %cst_22 {dimension_numbers = #tpu.dot_dimension_numbers<[1], [0], [0], [1], [0, 0, 1, 1], [], []>} : vector<28x112xf32>, vector<112x96xf32>, vector<28x96xf32> -> vector<28x96xf32>
    %31 = arith.addf %26, %30 : vector<28x96xf32>
    %32 = vector.extract_strided_slice %19 {offsets = [2, 0], sizes = [28, 112], strides = [1, 1]} : vector<30x112xf32> to vector<28x112xf32>
    %c2_23 = arith.constant 2 : index
    %c0_24 = arith.constant 0 : index
    %c0_25 = arith.constant 0 : index
    %33 = vector.load %arg4[%c2_23, %c0_24, %c0_25] : memref<3x112x96xf32, #tpu.memory_space<vmem>>, vector<1x112x96xf32>
    %34 = vector.shape_cast %33 : vector<1x112x96xf32> to vector<112x96xf32>
    %cst_26 = arith.constant dense<0.000000e+00> : vector<28x96xf32>
    %35 = tpu.matmul %32, %34, %cst_26 {dimension_numbers = #tpu.dot_dimension_numbers<[1], [0], [0], [1], [0, 0, 1, 1], [], []>} : vector<28x112xf32>, vector<112x96xf32>, vector<28x96xf32> -> vector<28x96xf32>
    %36 = arith.addf %31, %35 : vector<28x96xf32>
    %cst_27 = arith.constant 0.000000e+00 : f32
    %37 = vector.broadcast %cst_27 : f32 to vector<28x96xf32>
    %38 = arith.maximumf %36, %37 : vector<28x96xf32>
    %c0_28 = arith.constant 0 : index
    %c0_29 = arith.constant 0 : index
    %39 = vector.load %arg6[%c0_28, %c0_29] : memref<28x96xf32, #tpu.memory_space<vmem>>, vector<28x96xf32>
    tpu.vector_store %arg6[%c0_28, %c0_29], %38 {strides = array<i32>} : memref<28x96xf32, #tpu.memory_space<vmem>>, vector<28x96xf32>,
    return
  }
  func.func @transform_0(%arg0: i32) -> (i32, i32) {
    %c0_i32 = arith.constant 0 : i32
    %c0_i32_0 = arith.constant 0 : i32
    %c0_i32_1 = arith.constant 0 : i32
    return %c0_i32, %c0_i32_0 : i32, i32
  }
  func.func @transform_1(%arg0: i32) -> (i32, i32, i32) {
    %c0_i32 = arith.constant 0 : i32
    %c0_i32_0 = arith.constant 0 : i32
    %c0_i32_1 = arith.constant 0 : i32
    %c0_i32_2 = arith.constant 0 : i32
    return %c0_i32, %c0_i32_0, %c0_i32_1 : i32, i32, i32
  }
  func.func @transform_2(%arg0: i32) -> (i32, i32) {
    %c0_i32 = arith.constant 0 : i32
    %c0_i32_0 = arith.constant 0 : i32
    %c0_i32_1 = arith.constant 0 : i32
    return %c0_i32, %c0_i32_0 : i32, i32
  }
  func.func @transform_3(%arg0: i32) -> (i32, i32, i32) {
    %c0_i32 = arith.constant 0 : i32
    %c0_i32_0 = arith.constant 0 : i32
    %c0_i32_1 = arith.constant 0 : i32
    %c0_i32_2 = arith.constant 0 : i32
    return %c0_i32, %c0_i32_0, %c0_i32_1 : i32, i32, i32
  }
  func.func @transform_4(%arg0: i32) -> (i32, i32) {
    %c0_i32 = arith.constant 0 : i32
    %c0_i32_0 = arith.constant 0 : i32
    %c0_i32_1 = arith.constant 0 : i32
    return %c0_i32, %c0_i32_0 : i32, i32
  }
  func.func @transform_5(%arg0: i32) -> (i32, i32) {
    %c0_i32 = arith.constant 0 : i32
    %c0_i32_0 = arith.constant 0 : i32
    %c0_i32_1 = arith.constant 0 : i32
    return %c0_i32, %c0_i32_0 : i32, i32
  }
}

</mosaic_0001>

<llo_original>
// kernel: tpu_custom_call.1
$region0: #{tpu_custom_call.1}
  #allocation0 [shape = 'u32[]', space=smem, size = 0x4, offset = 0x4, fixed_abs, tag = 'smem constant byte address 0x4 - core index']
  #allocation1 [shape = 'u32[144,128]{1,0:T(1,128)}', space=vmem, size = 0x12000, scoped, tag = 'internal scratch']
  %s0 = inlined_call_operand.vmem [shape: f32[32,64], index: 0, kind: input, shape index: {}]
  %s1 = inlined_call_operand.vmem [shape: f32[3,64,112], index: 1, kind: input, shape index: {}]
  %s2 = inlined_call_operand.vmem [shape: f32[1,112], index: 2, kind: input, shape index: {}]
  %s3 = inlined_call_operand.vmem [shape: f32[3,112,96], index: 3, kind: input, shape index: {}]
  %s4 = inlined_call_operand.vmem [shape: f32[1,96], index: 4, kind: input, shape index: {}]
  %s5 = inlined_call_operand.hbm [shape: f32[28,96], index: 5, kind: output, shape index: {}]
  %s6 = sld [smem:[#allocation0]]
  $region30: #{tpu_custom_call.1} parent=0
    _
  %s8 = ssub.s32 1, %s6
  %s9 = scalar_select 0, %s8, %s6
  $region1: #{tpu_custom_call.1} parent=0
    #allocation2 [shape = 'u8[16384]{0}', space=vmem, size = 0x4000, scoped, tag = 'output window, operand 0, single buffered']
    #allocation3 [shape = 's32[1]{0}', space=sflag, size = 0x4, scoped, tag = 'scoped memory for tpu_custom_call.1']
    %10 = vsyncpa [#allocation3], 0
    // Predicated region
    $region2: #{tpu_custom_call.1} parent=1 // pred_check
      _
    $region3: #{tpu_custom_call.1} parent=1 // pred_check_branch
      %12 = sbr.rel (0) target = $region5
    $region4: #{tpu_custom_call.1} parent=1 // pred_region
      _
    $region5: #{tpu_custom_call.1} parent=1 // pred_fallthru
      _
    // Predicated region
    $region6: #{tpu_custom_call.1} parent=1 // pred_check
      _
    $region7: #{tpu_custom_call.1} parent=1 // pred_check_branch
      %14 = sbr.rel (0) target = $region9
    $region8: #{tpu_custom_call.1} parent=1 // pred_region
      _
    $region9: #{tpu_custom_call.1} parent=1 // pred_fallthru
      _
    // Predicated region
    $region10: #{tpu_custom_call.1} parent=1 // pred_check
      _
    $region11: #{tpu_custom_call.1} parent=1 // pred_check_branch
      %16 = sbr.rel (0) target = $region13
    $region12: #{tpu_custom_call.1} parent=1 // pred_region
      _
    $region13: #{tpu_custom_call.1} parent=1 // pred_fallthru
      _
    // Predicated region
    $region14: #{tpu_custom_call.1} parent=1 // pred_check
      _
    $region15: #{tpu_custom_call.1} parent=1 // pred_check_branch
      %18 = sbr.rel (0) target = $region17
    $region16: #{tpu_custom_call.1} parent=1 // pred_region
      _
    $region17: #{tpu_custom_call.1} parent=1 // pred_fallthru
      _
    // Predicated region
    $region18: #{tpu_custom_call.1} parent=1 // pred_check
      _
    $region19: #{tpu_custom_call.1} parent=1 // pred_check_branch
      %20 = sbr.rel (0) target = $region21
    $region20: #{tpu_custom_call.1} parent=1 // pred_region
      _
    $region21: #{tpu_custom_call.1} parent=1 // pred_fallthru
      _
    %v21 = vld [vmem:[%s0] sm:$0xff]
    %v22 = vld [vmem:[%s0 + $0x8] sm:$0xff]
    %v23 = vld [vmem:[%s0 + $0x10] sm:$0xff]
    %v24 = vld [vmem:[%s0 + $0x18] sm:$0xff]
    %v25 = vld [vmem:[%s2] sm:$0x1]
    %v26 = vld [vmem:[%s1] sm:$0xff]
    %v27 = vld [vmem:[%s1 + $0x8] sm:$0xff]
    %v28 = vld [vmem:[%s1 + $0x10] sm:$0xff]
    %v29 = vld [vmem:[%s1 + $0x18] sm:$0xff]
    %v30 = vld [vmem:[%s1 + $0x20] sm:$0xff]
    %v31 = vld [vmem:[%s1 + $0x28] sm:$0xff]
    %v32 = vld [vmem:[%s1 + $0x30] sm:$0xff]
    %v33 = vld [vmem:[%s1 + $0x38] sm:$0xff]
    %vm34 = vcmask 523264
    %v36 = vsel %vm34, %v21, 0
    %v39 = vsel %vm34, %v22, 0
    %v42 = vsel %vm34, %v23, 0
    %v45 = vsel %vm34, %v24, 0
    %47 = vmatprep.subr.mxu0 0.0
    %48 = vmatpush1.msra.mxu0 %v26
    %49 = vmatprep.subr.mxu0 0.0
    %50 = vmatpush1.msra.mxu0 %v27
    %51 = vmatprep.subr.mxu0 0.0
    %52 = vmatpush1.msra.mxu0 %v28
    %53 = vmatprep.subr.mxu0 0.0
    %54 = vmatpush1.msra.mxu0 %v29
    %55 = vmatprep.subr.mxu0 0.0
    %56 = vmatpush1.msra.mxu0 %v30
    %57 = vmatprep.subr.mxu0 0.0
    %58 = vmatpush1.msra.mxu0 %v31
    %59 = vmatprep.subr.mxu0 0.0
    %60 = vmatpush1.msra.mxu0 %v32
    %61 = vmatprep.subr.mxu0 0.0
    %62 = vmatpush1.msra.mxu0 %v33
    %63 = vmatprep.subr.mxu0 0.0
    %64 = vmatpush1.msra.mxu0 0.0
    %65 = vmatprep.subr.mxu0 0.0
    %66 = vmatpush1.msra.mxu0 0.0
    %67 = vmatprep.subr.mxu0 0.0
    %68 = vmatpush1.msra.mxu0 0.0
    %69 = vmatprep.subr.mxu0 0.0
    %70 = vmatpush1.msra.mxu0 0.0
    %71 = vmatprep.subr.mxu0 0.0
    %72 = vmatpush1.msra.mxu0 0.0
    %73 = vmatprep.subr.mxu0 0.0
    %74 = vmatpush1.msra.mxu0 0.0
    %75 = vmatprep.subr.mxu0 0.0
    %76 = vmatpush1.msra.mxu0 0.0
    %77 = vmatprep.subr.mxu0 0.0
    %78 = vmatpush1.msra.mxu0 0.0
    %79 = vmatprep.subr.mxu0 0.0
    %80 = vmatpush1.msra.mxu0 0.0
    %81 = vmatprep.subr.mxu0 0.0
    %82 = vmatpush1.msra.mxu0 0.0
    %83 = vmatprep.subr.mxu0 0.0
    %84 = vmatpush1.msra.mxu0 0.0
    %85 = vmatprep.subr.mxu0 0.0
    %86 = vmatpush1.msra.mxu0 0.0
    %87 = vmatprep.subr.mxu0 0.0
    %88 = vmatpush1.msra.mxu0 0.0
    %89 = vmatprep.subr.mxu0 0.0
    %90 = vmatpush1.msra.mxu0 0.0
    %91 = vmatprep.subr.mxu0 0.0
    %92 = vmatpush1.msra.mxu0 0.0
    %93 = vmatprep.subr.mxu0 0.0
    %94 = vmatpush1.msra.mxu0 0.0
    %95 = vmatprep.subr.mxu0 0.0
    %96 = vmatpush1.msra.mxu0 0.0
    %97 = vmatprep.subr.mxu0 0.0
    %98 = vmatpush1.msra.mxu0 0.0
    %99 = vmatprep.subr.mxu0 0.0
    %100 = vmatpush1.msra.mxu0 0.0
    %101 = vmatprep.subr.mxu0 0.0
    %102 = vmatpush1.msra.mxu0 0.0
    %103 = vmatprep.subr.mxu0 0.0
    %104 = vmatpush1.msra.mxu0 0.0
    %105 = vmatprep.subr.mxu0 0.0
    %106 = vmatpush1.msra.mxu0 0.0
    %107 = vmatprep.subr.mxu0 0.0
    %108 = vmatpush1.msra.mxu0 0.0
    %109 = vmatprep.subr.mxu0 0.0
    %110 = vmatpush1.msra.mxu0 0.0
    %111 = vmatprep.mubr.f32.mxu0 0.0
    %112 = vmatmul.mubr.f32.gmra.mrb[0].mxu0 %v36
    %v113 = vpop.f32.mrb[0].mxu0
    %v114 = vadd.f32 0.0, %v113
    %v115 = vpop.f32.mrb[0].mxu0
    %116 = vmatprep.mubr.f32.mxu0 0.0
    %117 = vmatmul.mubr.f32.gmra.mrb[0].mxu0 %v39
    %v118 = vpop.f32.mrb[0].mxu0
    %v119 = vadd.f32 0.0, %v118
    %v120 = vpop.f32.mrb[0].mxu0
    %121 = vmatprep.mubr.f32.mxu0 0.0
    %122 = vmatmul.mubr.f32.gmra.mrb[0].mxu0 %v42
    %v123 = vpop.f32.mrb[0].mxu0
    %v124 = vadd.f32 0.0, %v123
    %v125 = vpop.f32.mrb[0].mxu0
    %126 = vmatprep.mubr.f32.mxu0 0.0
    %127 = vmatmul.mubr.f32.gmra.mrb[0].mxu0 %v45
    %v128 = vpop.f32.mrb[0].mxu0
    %v129 = vadd.f32 0.0, %v128
    %v130 = vpop.f32.mrb[0].mxu0
    %131 = vdwg.mxu0
    %v133 = vlaneseq
    %v134 = vshrl.u32 %v133, 7
    %v135 = vsub.s32 0, %v134
    %v136 = vrot.slane %v25, %v135
    %v138 = vadd.f32 %v136, %v114
    %v139 = vadd.f32 %v136, %v119
    %v140 = vadd.f32 %v136, %v124
    %v141 = vadd.f32 %v136, %v129
    %s142 = scalar_lea.vmem %s1, 64
    %v143 = vld [vmem:[%s142] sm:$0xff]
    %v144 = vld [vmem:[%s142 + $0x8] sm:$0xff]
    %v145 = vld [vmem:[%s142 + $0x10] sm:$0xff]
    %v146 = vld [vmem:[%s142 + $0x18] sm:$0xff]
    %v147 = vld [vmem:[%s142 + $0x20] sm:$0xff]
    %v148 = vld [vmem:[%s142 + $0x28] sm:$0xff]
    %v149 = vld [vmem:[%s142 + $0x30] sm:$0xff]
    %v150 = vld [vmem:[%s142 + $0x38] sm:$0xff]
    %vm151 = vcmask 1046528
    %v152 = vrot.slane %v21, 1
    %v153 = vrot.slane %v22, 1
    %v154 = vsel %vm151, %v152, %v153
    %v155 = vrot.slane %v23, 1
    %v156 = vsel %vm151, %v153, %v155
    %v157 = vrot.slane %v24, 1
    %v158 = vsel %vm151, %v155, %v157
    %v159 = vsel %vm34, %v154, 0
    %v161 = vsel %vm34, %v156, 0
    %v163 = vsel %vm34, %v158, 0
    %v165 = vsel %vm34, %v157, 0
    %167 = vmatprep.subr.mxu0 0.0
    %168 = vmatpush1.msra.mxu0 %v143
    %169 = vmatprep.subr.mxu0 0.0
    %170 = vmatpush1.msra.mxu0 %v144
    %171 = vmatprep.subr.mxu0 0.0
    %172 = vmatpush1.msra.mxu0 %v145
    %173 = vmatprep.subr.mxu0 0.0
    %174 = vmatpush1.msra.mxu0 %v146
    %175 = vmatprep.subr.mxu0 0.0
    %176 = vmatpush1.msra.mxu0 %v147
    %177 = vmatprep.subr.mxu0 0.0
    %178 = vmatpush1.msra.mxu0 %v148
    %179 = vmatprep.subr.mxu0 0.0
    %180 = vmatpush1.msra.mxu0 %v149
    %181 = vmatprep.subr.mxu0 0.0
    %182 = vmatpush1.msra.mxu0 %v150
    %183 = vmatprep.subr.mxu0 0.0
    %184 = vmatpush1.msra.mxu0 0.0
    %185 = vmatprep.subr.mxu0 0.0
    %186 = vmatpush1.msra.mxu0 0.0
    %187 = vmatprep.subr.mxu0 0.0
    %188 = vmatpush1.msra.mxu0 0.0
    %189 = vmatprep.subr.mxu0 0.0
    %190 = vmatpush1.msra.mxu0 0.0
    %191 = vmatprep.subr.mxu0 0.0
    %192 = vmatpush1.msra.mxu0 0.0
    %193 = vmatprep.subr.mxu0 0.0
    %194 = vmatpush1.msra.mxu0 0.0
    %195 = vmatprep.subr.mxu0 0.0
    %196 = vmatpush1.msra.mxu0 0.0
    %197 = vmatprep.subr.mxu0 0.0
    %198 = vmatpush1.msra.mxu0 0.0
    %199 = vmatprep.subr.mxu0 0.0
    %200 = vmatpush1.msra.mxu0 0.0
    %201 = vmatprep.subr.mxu0 0.0
    %202 = vmatpush1.msra.mxu0 0.0
    %203 = vmatprep.subr.mxu0 0.0
    %204 = vmatpush1.msra.mxu0 0.0
    %205 = vmatprep.subr.mxu0 0.0
    %206 = vmatpush1.msra.mxu0 0.0
    %207 = vmatprep.subr.mxu0 0.0
    %208 = vmatpush1.msra.mxu0 0.0
    %209 = vmatprep.subr.mxu0 0.0
    %210 = vmatpush1.msra.mxu0 0.0
    %211 = vmatprep.subr.mxu0 0.0
    %212 = vmatpush1.msra.mxu0 0.0
    %213 = vmatprep.subr.mxu0 0.0
    %214 = vmatpush1.msra.mxu0 0.0
    %215 = vmatprep.subr.mxu0 0.0
    %216 = vmatpush1.msra.mxu0 0.0
    %217 = vmatprep.subr.mxu0 0.0
    %218 = vmatpush1.msra.mxu0 0.0
    %219 = vmatprep.subr.mxu0 0.0
    %220 = vmatpush1.msra.mxu0 0.0
    %221 = vmatprep.subr.mxu0 0.0
    %222 = vmatpush1.msra.mxu0 0.0
    %223 = vmatprep.subr.mxu0 0.0
    %224 = vmatpush1.msra.mxu0 0.0
    %225 = vmatprep.subr.mxu0 0.0
    %226 = vmatpush1.msra.mxu0 0.0
    %227 = vmatprep.subr.mxu0 0.0
    %228 = vmatpush1.msra.mxu0 0.0
    %229 = vmatprep.subr.mxu0 0.0
    %230 = vmatpush1.msra.mxu0 0.0
    %231 = vmatprep.mubr.f32.mxu0 0.0
    %232 = vmatmul.mubr.f32.gmra.mrb[0].mxu0 %v159
    %v233 = vpop.f32.mrb[0].mxu0
    %v234 = vadd.f32 0.0, %v233
    %v235 = vpop.f32.mrb[0].mxu0
    %236 = vmatprep.mubr.f32.mxu0 0.0
    %237 = vmatmul.mubr.f32.gmra.mrb[0].mxu0 %v161
    %v238 = vpop.f32.mrb[0].mxu0
    %v239 = vadd.f32 0.0, %v238
    %v240 = vpop.f32.mrb[0].mxu0
    %241 = vmatprep.mubr.f32.mxu0 0.0
    %242 = vmatmul.mubr.f32.gmra.mrb[0].mxu0 %v163
    %v243 = vpop.f32.mrb[0].mxu0
    %v244 = vadd.f32 0.0, %v243
    %v245 = vpop.f32.mrb[0].mxu0
    %246 = vmatprep.mubr.f32.mxu0 0.0
    %247 = vmatmul.mubr.f32.gmra.mrb[0].mxu0 %v165
    %v248 = vpop.f32.mrb[0].mxu0
    %v249 = vadd.f32 0.0, %v248
    %v250 = vpop.f32.mrb[0].mxu0
    %251 = vdwg.mxu0
    %v252 = vadd.f32 %v138, %v234
    %v253 = vadd.f32 %v139, %v239
    %v254 = vadd.f32 %v140, %v244
    %v255 = vadd.f32 %v141, %v249
    %s256 = scalar_lea.vmem %s1, 128
    %v257 = vld [vmem:[%s256] sm:$0xff]
    %v258 = vld [vmem:[%s256 + $0x8] sm:$0xff]
    %v259 = vld [vmem:[%s256 + $0x10] sm:$0xff]
    %v260 = vld [vmem:[%s256 + $0x18] sm:$0xff]
    %v261 = vld [vmem:[%s256 + $0x20] sm:$0xff]
    %v262 = vld [vmem:[%s256 + $0x28] sm:$0xff]
    %v263 = vld [vmem:[%s256 + $0x30] sm:$0xff]
    %v264 = vld [vmem:[%s256 + $0x38] sm:$0xff]
    %vm265 = vcmask 1045504
    %v266 = vrot.slane %v21, 2
    %v267 = vrot.slane %v22, 2
    %v268 = vsel %vm265, %v266, %v267
    %v269 = vrot.slane %v23, 2
    %v270 = vsel %vm265, %v267, %v269
    %v271 = vrot.slane %v24, 2
    %v272 = vsel %vm265, %v269, %v271
    %v273 = vsel %vm34, %v268, 0
    %v275 = vsel %vm34, %v270, 0
    %v277 = vsel %vm34, %v272, 0
    %v279 = vsel %vm34, %v271, 0
    %281 = vmatprep.subr.mxu0 0.0
    %282 = vmatpush1.msra.mxu0 %v257
    %283 = vmatprep.subr.mxu0 0.0
    %284 = vmatpush1.msra.mxu0 %v258
    %285 = vmatprep.subr.mxu0 0.0
    %286 = vmatpush1.msra.mxu0 %v259
    %287 = vmatprep.subr.mxu0 0.0
    %288 = vmatpush1.msra.mxu0 %v260
    %289 = vmatprep.subr.mxu0 0.0
    %290 = vmatpush1.msra.mxu0 %v261
    %291 = vmatprep.subr.mxu0 0.0
    %292 = vmatpush1.msra.mxu0 %v262
    %293 = vmatprep.subr.mxu0 0.0
    %294 = vmatpush1.msra.mxu0 %v263
    %295 = vmatprep.subr.mxu0 0.0
    %296 = vmatpush1.msra.mxu0 %v264
    %297 = vmatprep.subr.mxu0 0.0
    %298 = vmatpush1.msra.mxu0 0.0
    %299 = vmatprep.subr.mxu0 0.0
    %300 = vmatpush1.msra.mxu0 0.0
    %301 = vmatprep.subr.mxu0 0.0
    %302 = vmatpush1.msra.mxu0 0.0
    %303 = vmatprep.subr.mxu0 0.0
    %304 = vmatpush1.msra.mxu0 0.0
    %305 = vmatprep.subr.mxu0 0.0
    %306 = vmatpush1.msra.mxu0 0.0
    %307 = vmatprep.subr.mxu0 0.0
    %308 = vmatpush1.msra.mxu0 0.0
    %309 = vmatprep.subr.mxu0 0.0
    %310 = vmatpush1.msra.mxu0 0.0
    %311 = vmatprep.subr.mxu0 0.0
    %312 = vmatpush1.msra.mxu0 0.0
    %313 = vmatprep.subr.mxu0 0.0
    %314 = vmatpush1.msra.mxu0 0.0
    %315 = vmatprep.subr.mxu0 0.0
    %316 = vmatpush1.msra.mxu0 0.0
    %317 = vmatprep.subr.mxu0 0.0
    %318 = vmatpush1.msra.mxu0 0.0
    %319 = vmatprep.subr.mxu0 0.0
    %320 = vmatpush1.msra.mxu0 0.0
    %321 = vmatprep.subr.mxu0 0.0
    %322 = vmatpush1.msra.mxu0 0.0
    %323 = vmatprep.subr.mxu0 0.0
    %324 = vmatpush1.msra.mxu0 0.0
    %325 = vmatprep.subr.mxu0 0.0
    %326 = vmatpush1.msra.mxu0 0.0
    %327 = vmatprep.subr.mxu0 0.0
    %328 = vmatpush1.msra.mxu0 0.0
    %329 = vmatprep.subr.mxu0 0.0
    %330 = vmatpush1.msra.mxu0 0.0
    %331 = vmatprep.subr.mxu0 0.0
    %332 = vmatpush1.msra.mxu0 0.0
    %333 = vmatprep.subr.mxu0 0.0
    %334 = vmatpush1.msra.mxu0 0.0
    %335 = vmatprep.subr.mxu0 0.0
    %336 = vmatpush1.msra.mxu0 0.0
    %337 = vmatprep.subr.mxu0 0.0
    %338 = vmatpush1.msra.mxu0 0.0
    %339 = vmatprep.subr.mxu0 0.0
    %340 = vmatpush1.msra.mxu0 0.0
    %341 = vmatprep.subr.mxu0 0.0
    %342 = vmatpush1.msra.mxu0 0.0
    %343 = vmatprep.subr.mxu0 0.0
    %344 = vmatpush1.msra.mxu0 0.0
    %345 = vmatprep.mubr.f32.mxu0 0.0
    %346 = vmatmul.mubr.f32.gmra.mrb[0].mxu0 %v273
    %v347 = vpop.f32.mrb[0].mxu0
    %v348 = vadd.f32 0.0, %v347
    %v349 = vpop.f32.mrb[0].mxu0
    %350 = vmatprep.mubr.f32.mxu0 0.0
    %351 = vmatmul.mubr.f32.gmra.mrb[0].mxu0 %v275
    %v352 = vpop.f32.mrb[0].mxu0
    %v353 = vadd.f32 0.0, %v352
    %v354 = vpop.f32.mrb[0].mxu0
    %355 = vmatprep.mubr.f32.mxu0 0.0
    %356 = vmatmul.mubr.f32.gmra.mrb[0].mxu0 %v277
    %v357 = vpop.f32.mrb[0].mxu0
    %v358 = vadd.f32 0.0, %v357
    %v359 = vpop.f32.mrb[0].mxu0
    %360 = vmatprep.mubr.f32.mxu0 0.0
    %361 = vmatmul.mubr.f32.gmra.mrb[0].mxu0 %v279
    %v362 = vpop.f32.mrb[0].mxu0
    %v363 = vadd.f32 0.0, %v362
    %v364 = vpop.f32.mrb[0].mxu0
    %365 = vdwg.mxu0
    %v366 = vadd.f32 %v252, %v348
    %v367 = vadd.f32 %v253, %v353
    %v368 = vadd.f32 %v254, %v358
    %v369 = vadd.f32 %v255, %v363
    %v370 = vmax.f32 %v366, 0.0
    %v371 = vmax.f32 %v367, 0.0
    %v372 = vmax.f32 %v368, 0.0
    %v373 = vmax.f32 %v369, 0.0
    %v374 = vld [vmem:[%s4] sm:$0x1]
    %v375 = vld [vmem:[%s3] sm:$0xff]
    %v376 = vld [vmem:[%s3 + $0x8] sm:$0xff]
    %v377 = vld [vmem:[%s3 + $0x10] sm:$0xff]
    %v378 = vld [vmem:[%s3 + $0x18] sm:$0xff]
    %v379 = vld [vmem:[%s3 + $0x20] sm:$0xff]
    %v380 = vld [vmem:[%s3 + $0x28] sm:$0xff]
    %v381 = vld [vmem:[%s3 + $0x30] sm:$0xff]
    %v382 = vld [vmem:[%s3 + $0x38] sm:$0xff]
    %v383 = vld [vmem:[%s3 + $0x40] sm:$0xff]
    %v384 = vld [vmem:[%s3 + $0x48] sm:$0xff]
    %v385 = vld [vmem:[%s3 + $0x50] sm:$0xff]
    %v386 = vld [vmem:[%s3 + $0x58] sm:$0xff]
    %v387 = vld [vmem:[%s3 + $0x60] sm:$0xff]
    %v388 = vld [vmem:[%s3 + $0x68] sm:$0xff]
    %vm389 = vcmask 916480
    %v391 = vsel %vm389, %v370, 0
    %v394 = vsel %vm389, %v371, 0
    %v397 = vsel %vm389, %v372, 0
    %v400 = vsel %vm389, %v373, 0
    %402 = vmatprep.subr.mxu0 0.0
    %403 = vmatpush1.msra.mxu0 %v375
    %404 = vmatprep.subr.mxu0 0.0
    %405 = vmatpush1.msra.mxu0 %v376
    %406 = vmatprep.subr.mxu0 0.0
    %407 = vmatpush1.msra.mxu0 %v377
    %408 = vmatprep.subr.mxu0 0.0
    %409 = vmatpush1.msra.mxu0 %v378
    %410 = vmatprep.subr.mxu0 0.0
    %411 = vmatpush1.msra.mxu0 %v379
    %412 = vmatprep.subr.mxu0 0.0
    %413 = vmatpush1.msra.mxu0 %v380
    %414 = vmatprep.subr.mxu0 0.0
    %415 = vmatpush1.msra.mxu0 %v381
    %416 = vmatprep.subr.mxu0 0.0
    %417 = vmatpush1.msra.mxu0 %v382
    %418 = vmatprep.subr.mxu0 0.0
    %419 = vmatpush1.msra.mxu0 %v383
    %420 = vmatprep.subr.mxu0 0.0
    %421 = vmatpush1.msra.mxu0 %v384
    %422 = vmatprep.subr.mxu0 0.0
    %423 = vmatpush1.msra.mxu0 %v385
    %424 = vmatprep.subr.mxu0 0.0
    %425 = vmatpush1.msra.mxu0 %v386
    %426 = vmatprep.subr.mxu0 0.0
    %427 = vmatpush1.msra.mxu0 %v387
    %428 = vmatprep.subr.mxu0 0.0
    %429 = vmatpush1.msra.mxu0 %v388
    %430 = vmatprep.subr.mxu0 0.0
    %431 = vmatpush1.msra.mxu0 0.0
    %432 = vmatprep.subr.mxu0 0.0
    %433 = vmatpush1.msra.mxu0 0.0
    %434 = vmatprep.subr.mxu0 0.0
    %435 = vmatpush1.msra.mxu0 0.0
    %436 = vmatprep.subr.mxu0 0.0
    %437 = vmatpush1.msra.mxu0 0.0
    %438 = vmatprep.subr.mxu0 0.0
    %439 = vmatpush1.msra.mxu0 0.0
    %440 = vmatprep.subr.mxu0 0.0
    %441 = vmatpush1.msra.mxu0 0.0
    %442 = vmatprep.subr.mxu0 0.0
    %443 = vmatpush1.msra.mxu0 0.0
    %444 = vmatprep.subr.mxu0 0.0
    %445 = vmatpush1.msra.mxu0 0.0
    %446 = vmatprep.subr.mxu0 0.0
    %447 = vmatpush1.msra.mxu0 0.0
    %448 = vmatprep.subr.mxu0 0.0
    %449 = vmatpush1.msra.mxu0 0.0
    %450 = vmatprep.subr.mxu0 0.0
    %451 = vmatpush1.msra.mxu0 0.0
    %452 = vmatprep.subr.mxu0 0.0
    %453 = vmatpush1.msra.mxu0 0.0
    %454 = vmatprep.subr.mxu0 0.0
    %455 = vmatpush1.msra.mxu0 0.0
    %456 = vmatprep.subr.mxu0 0.0
    %457 = vmatpush1.msra.mxu0 0.0
    %458 = vmatprep.subr.mxu0 0.0
    %459 = vmatpush1.msra.mxu0 0.0
    %460 = vmatprep.subr.mxu0 0.0
    %461 = vmatpush1.msra.mxu0 0.0
    %462 = vmatprep.subr.mxu0 0.0
    %463 = vmatpush1.msra.mxu0 0.0
    %464 = vmatprep.subr.mxu0 0.0
    %465 = vmatpush1.msra.mxu0 0.0
    %466 = vmatprep.mubr.f32.mxu0 0.0
    %467 = vmatmul.mubr.f32.gmra.mrb[0].mxu0 %v391
    %v468 = vpop.f32.mrb[0].mxu0
    %v469 = vadd.f32 0.0, %v468
    %v470 = vpop.f32.mrb[0].mxu0
    %471 = vmatprep.mubr.f32.mxu0 0.0
    %472 = vmatmul.mubr.f32.gmra.mrb[0].mxu0 %v394
    %v473 = vpop.f32.mrb[0].mxu0
    %v474 = vadd.f32 0.0, %v473
    %v475 = vpop.f32.mrb[0].mxu0
    %476 = vmatprep.mubr.f32.mxu0 0.0
    %477 = vmatmul.mubr.f32.gmra.mrb[0].mxu0 %v397
    %v478 = vpop.f32.mrb[0].mxu0
    %v479 = vadd.f32 0.0, %v478
    %v480 = vpop.f32.mrb[0].mxu0
    %481 = vmatprep.mubr.f32.mxu0 0.0
    %482 = vmatmul.mubr.f32.gmra.mrb[0].mxu0 %v400
    %v483 = vpop.f32.mrb[0].mxu0
    %v484 = vadd.f32 0.0, %v483
    %v485 = vpop.f32.mrb[0].mxu0
    %486 = vdwg.mxu0
    %v488 = vlaneseq
    %v489 = vshrl.u32 %v488, 7
    %v490 = vsub.s32 0, %v489
    %v491 = vrot.slane %v374, %v490
    %v493 = vadd.f32 %v491, %v469
    %v494 = vadd.f32 %v491, %v474
    %v495 = vadd.f32 %v491, %v479
    %v496 = vadd.f32 %v491, %v484
    %s497 = scalar_lea.vmem %s3, 112
    %v498 = vld [vmem:[%s497] sm:$0xff]
    %v499 = vld [vmem:[%s497 + $0x8] sm:$0xff]
    %v500 = vld [vmem:[%s497 + $0x10] sm:$0xff]
    %v501 = vld [vmem:[%s497 + $0x18] sm:$0xff]
    %v502 = vld [vmem:[%s497 + $0x20] sm:$0xff]
    %v503 = vld [vmem:[%s497 + $0x28] sm:$0xff]
    %v504 = vld [vmem:[%s497 + $0x30] sm:$0xff]
    %v505 = vld [vmem:[%s497 + $0x38] sm:$0xff]
    %v506 = vld [vmem:[%s497 + $0x40] sm:$0xff]
    %v507 = vld [vmem:[%s497 + $0x48] sm:$0xff]
    %v508 = vld [vmem:[%s497 + $0x50] sm:$0xff]
    %v509 = vld [vmem:[%s497 + $0x58] sm:$0xff]
    %v510 = vld [vmem:[%s497 + $0x60] sm:$0xff]
    %v511 = vld [vmem:[%s497 + $0x68] sm:$0xff]
    %v512 = vrot.slane %v370, 1
    %v513 = vrot.slane %v371, 1
    %v514 = vsel %vm151, %v512, %v513
    %v515 = vrot.slane %v372, 1
    %v516 = vsel %vm151, %v513, %v515
    %v517 = vrot.slane %v373, 1
    %v518 = vsel %vm151, %v515, %v517
    %v519 = vsel %vm389, %v514, 0
    %v521 = vsel %vm389, %v516, 0
    %v523 = vsel %vm389, %v518, 0
    %v525 = vsel %vm389, %v517, 0
    %527 = vmatprep.subr.mxu0 0.0
    %528 = vmatpush1.msra.mxu0 %v498
    %529 = vmatprep.subr.mxu0 0.0
    %530 = vmatpush1.msra.mxu0 %v499
    %531 = vmatprep.subr.mxu0 0.0
    %532 = vmatpush1.msra.mxu0 %v500
    %533 = vmatprep.subr.mxu0 0.0
    %534 = vmatpush1.msra.mxu0 %v501
    %535 = vmatprep.subr.mxu0 0.0
    %536 = vmatpush1.msra.mxu0 %v502
    %537 = vmatprep.subr.mxu0 0.0
    %538 = vmatpush1.msra.mxu0 %v503
    %539 = vmatprep.subr.mxu0 0.0
    %540 = vmatpush1.msra.mxu0 %v504
    %541 = vmatprep.subr.mxu0 0.0
    %542 = vmatpush1.msra.mxu0 %v505
    %543 = vmatprep.subr.mxu0 0.0
    %544 = vmatpush1.msra.mxu0 %v506
    %545 = vmatprep.subr.mxu0 0.0
    %546 = vmatpush1.msra.mxu0 %v507
    %547 = vmatprep.subr.mxu0 0.0
    %548 = vmatpush1.msra.mxu0 %v508
    %549 = vmatprep.subr.mxu0 0.0
    %550 = vmatpush1.msra.mxu0 %v509
    %551 = vmatprep.subr.mxu0 0.0
    %552 = vmatpush1.msra.mxu0 %v510
    %553 = vmatprep.subr.mxu0 0.0
    %554 = vmatpush1.msra.mxu0 %v511
    %555 = vmatprep.subr.mxu0 0.0
    %556 = vmatpush1.msra.mxu0 0.0
    %557 = vmatprep.subr.mxu0 0.0
    %558 = vmatpush1.msra.mxu0 0.0
    %559 = vmatprep.subr.mxu0 0.0
    %560 = vmatpush1.msra.mxu0 0.0
    %561 = vmatprep.subr.mxu0 0.0
    %562 = vmatpush1.msra.mxu0 0.0
    %563 = vmatprep.subr.mxu0 0.0
    %564 = vmatpush1.msra.mxu0 0.0
    %565 = vmatprep.subr.mxu0 0.0
    %566 = vmatpush1.msra.mxu0 0.0
    %567 = vmatprep.subr.mxu0 0.0
    %568 = vmatpush1.msra.mxu0 0.0
    %569 = vmatprep.subr.mxu0 0.0
    %570 = vmatpush1.msra.mxu0 0.0
    %571 = vmatprep.subr.mxu0 0.0
    %572 = vmatpush1.msra.mxu0 0.0
    %573 = vmatprep.subr.mxu0 0.0
    %574 = vmatpush1.msra.mxu0 0.0
    %575 = vmatprep.subr.mxu0 0.0
    %576 = vmatpush1.msra.mxu0 0.0
    %577 = vmatprep.subr.mxu0 0.0
    %578 = vmatpush1.msra.mxu0 0.0
    %579 = vmatprep.subr.mxu0 0.0
    %580 = vmatpush1.msra.mxu0 0.0
    %581 = vmatprep.subr.mxu0 0.0
    %582 = vmatpush1.msra.mxu0 0.0
    %583 = vmatprep.subr.mxu0 0.0
    %584 = vmatpush1.msra.mxu0 0.0
    %585 = vmatprep.subr.mxu0 0.0
    %586 = vmatpush1.msra.mxu0 0.0
    %587 = vmatprep.subr.mxu0 0.0
    %588 = vmatpush1.msra.mxu0 0.0
    %589 = vmatprep.subr.mxu0 0.0
    %590 = vmatpush1.msra.mxu0 0.0
    %591 = vmatprep.mubr.f32.mxu0 0.0
    %592 = vmatmul.mubr.f32.gmra.mrb[0].mxu0 %v519
    %v593 = vpop.f32.mrb[0].mxu0
    %v594 = vadd.f32 0.0, %v593
    %v595 = vpop.f32.mrb[0].mxu0
    %596 = vmatprep.mubr.f32.mxu0 0.0
    %597 = vmatmul.mubr.f32.gmra.mrb[0].mxu0 %v521
    %v598 = vpop.f32.mrb[0].mxu0
    %v599 = vadd.f32 0.0, %v598
    %v600 = vpop.f32.mrb[0].mxu0
    %601 = vmatprep.mubr.f32.mxu0 0.0
    %602 = vmatmul.mubr.f32.gmra.mrb[0].mxu0 %v523
    %v603 = vpop.f32.mrb[0].mxu0
    %v604 = vadd.f32 0.0, %v603
    %v605 = vpop.f32.mrb[0].mxu0
    %606 = vmatprep.mubr.f32.mxu0 0.0
    %607 = vmatmul.mubr.f32.gmra.mrb[0].mxu0 %v525
    %v608 = vpop.f32.mrb[0].mxu0
    %v609 = vadd.f32 0.0, %v608
    %v610 = vpop.f32.mrb[0].mxu0
    %611 = vdwg.mxu0
    %v612 = vadd.f32 %v493, %v594
    %v613 = vadd.f32 %v494, %v599
    %v614 = vadd.f32 %v495, %v604
    %v615 = vadd.f32 %v496, %v609
    %s616 = scalar_lea.vmem %s3, 224
    %v617 = vld [vmem:[%s616] sm:$0xff]
    %v618 = vld [vmem:[%s616 + $0x8] sm:$0xff]
    %v619 = vld [vmem:[%s616 + $0x10] sm:$0xff]
    %v620 = vld [vmem:[%s616 + $0x18] sm:$0xff]
    %v621 = vld [vmem:[%s616 + $0x20] sm:$0xff]
    %v622 = vld [vmem:[%s616 + $0x28] sm:$0xff]
    %v623 = vld [vmem:[%s616 + $0x30] sm:$0xff]
    %v624 = vld [vmem:[%s616 + $0x38] sm:$0xff]
    %v625 = vld [vmem:[%s616 + $0x40] sm:$0xff]
    %v626 = vld [vmem:[%s616 + $0x48] sm:$0xff]
    %v627 = vld [vmem:[%s616 + $0x50] sm:$0xff]
    %v628 = vld [vmem:[%s616 + $0x58] sm:$0xff]
    %v629 = vld [vmem:[%s616 + $0x60] sm:$0xff]
    %v630 = vld [vmem:[%s616 + $0x68] sm:$0xff]
    %v631 = vrot.slane %v370, 2
    %v632 = vrot.slane %v371, 2
    %v633 = vsel %vm265, %v631, %v632
    %v634 = vrot.slane %v372, 2
    %v635 = vsel %vm265, %v632, %v634
    %v636 = vrot.slane %v373, 2
    %v637 = vsel %vm265, %v634, %v636
    %v638 = vsel %vm389, %v633, 0
    %v640 = vsel %vm389, %v635, 0
    %v642 = vsel %vm389, %v637, 0
    %v644 = vsel %vm389, %v636, 0
    %646 = vmatprep.subr.mxu0 0.0
    %647 = vmatpush1.msra.mxu0 %v617
    %648 = vmatprep.subr.mxu0 0.0
    %649 = vmatpush1.msra.mxu0 %v618
    %650 = vmatprep.subr.mxu0 0.0
    %651 = vmatpush1.msra.mxu0 %v619
    %652 = vmatprep.subr.mxu0 0.0
    %653 = vmatpush1.msra.mxu0 %v620
    %654 = vmatprep.subr.mxu0 0.0
    %655 = vmatpush1.msra.mxu0 %v621
    %656 = vmatprep.subr.mxu0 0.0
    %657 = vmatpush1.msra.mxu0 %v622
    %658 = vmatprep.subr.mxu0 0.0
    %659 = vmatpush1.msra.mxu0 %v623
    %660 = vmatprep.subr.mxu0 0.0
    %661 = vmatpush1.msra.mxu0 %v624
    %662 = vmatprep.subr.mxu0 0.0
    %663 = vmatpush1.msra.mxu0 %v625
    %664 = vmatprep.subr.mxu0 0.0
    %665 = vmatpush1.msra.mxu0 %v626
    %666 = vmatprep.subr.mxu0 0.0
    %667 = vmatpush1.msra.mxu0 %v627
    %668 = vmatprep.subr.mxu0 0.0
    %669 = vmatpush1.msra.mxu0 %v628
    %670 = vmatprep.subr.mxu0 0.0
    %671 = vmatpush1.msra.mxu0 %v629
    %672 = vmatprep.subr.mxu0 0.0
    %673 = vmatpush1.msra.mxu0 %v630
    %674 = vmatprep.subr.mxu0 0.0
    %675 = vmatpush1.msra.mxu0 0.0
    %676 = vmatprep.subr.mxu0 0.0
    %677 = vmatpush1.msra.mxu0 0.0
    %678 = vmatprep.subr.mxu0 0.0
    %679 = vmatpush1.msra.mxu0 0.0
    %680 = vmatprep.subr.mxu0 0.0
    %681 = vmatpush1.msra.mxu0 0.0
    %682 = vmatprep.subr.mxu0 0.0
    %683 = vmatpush1.msra.mxu0 0.0
    %684 = vmatprep.subr.mxu0 0.0
    %685 = vmatpush1.msra.mxu0 0.0
    %686 = vmatprep.subr.mxu0 0.0
    %687 = vmatpush1.msra.mxu0 0.0
    %688 = vmatprep.subr.mxu0 0.0
    %689 = vmatpush1.msra.mxu0 0.0
    %690 = vmatprep.subr.mxu0 0.0
    %691 = vmatpush1.msra.mxu0 0.0
    %692 = vmatprep.subr.mxu0 0.0
    %693 = vmatpush1.msra.mxu0 0.0
    %694 = vmatprep.subr.mxu0 0.0
    %695 = vmatpush1.msra.mxu0 0.0
    %696 = vmatprep.subr.mxu0 0.0
    %697 = vmatpush1.msra.mxu0 0.0
    %698 = vmatprep.subr.mxu0 0.0
    %699 = vmatpush1.msra.mxu0 0.0
    %700 = vmatprep.subr.mxu0 0.0
    %701 = vmatpush1.msra.mxu0 0.0
    %702 = vmatprep.subr.mxu0 0.0
    %703 = vmatpush1.msra.mxu0 0.0
    %704 = vmatprep.subr.mxu0 0.0
    %705 = vmatpush1.msra.mxu0 0.0
    %706 = vmatprep.subr.mxu0 0.0
    %707 = vmatpush1.msra.mxu0 0.0
    %708 = vmatprep.subr.mxu0 0.0
    %709 = vmatpush1.msra.mxu0 0.0
    %710 = vmatprep.mubr.f32.mxu0 0.0
    %711 = vmatmul.mubr.f32.gmra.mrb[0].mxu0 %v638
    %v712 = vpop.f32.mrb[0].mxu0
    %v713 = vadd.f32 0.0, %v712
    %v714 = vpop.f32.mrb[0].mxu0
    %715 = vmatprep.mubr.f32.mxu0 0.0
    %716 = vmatmul.mubr.f32.gmra.mrb[0].mxu0 %v640
    %v717 = vpop.f32.mrb[0].mxu0
    %v718 = vadd.f32 0.0, %v717
    %v719 = vpop.f32.mrb[0].mxu0
    %720 = vmatprep.mubr.f32.mxu0 0.0
    %721 = vmatmul.mubr.f32.gmra.mrb[0].mxu0 %v642
    %v722 = vpop.f32.mrb[0].mxu0
    %v723 = vadd.f32 0.0, %v722
    %v724 = vpop.f32.mrb[0].mxu0
    %725 = vmatprep.mubr.f32.mxu0 0.0
    %726 = vmatmul.mubr.f32.gmra.mrb[0].mxu0 %v644
    %v727 = vpop.f32.mrb[0].mxu0
    %v728 = vadd.f32 0.0, %v727
    %v729 = vpop.f32.mrb[0].mxu0
    %730 = vdwg.mxu0
    %v731 = vadd.f32 %v612, %v713
    %v732 = vadd.f32 %v613, %v718
    %v733 = vadd.f32 %v614, %v723
    %v734 = vadd.f32 %v615, %v728
    %v735 = vmax.f32 %v731, 0.0
    %v736 = vmax.f32 %v732, 0.0
    %v737 = vmax.f32 %v733, 0.0
    %v738 = vmax.f32 %v734, 0.0
    %vm739 = vcmask 785408
    %740 = vst.msk [vmem:[#allocation2] sm:$0xff] %vm739, %v735
    %741 = vst.msk [vmem:[#allocation2 + $0x8] sm:$0xff] %vm739, %v736
    %742 = vst.msk [vmem:[#allocation2 + $0x10] sm:$0xff] %vm739, %v737
    %vm743 = vcmask 781312
    %744 = vst.msk [vmem:[#allocation2 + $0x18] sm:$0xf] %vm743, %v738
    // Predicated region
    $region22: #{tpu_custom_call.1} parent=1 // pred_check
      _
    $region23: #{tpu_custom_call.1} parent=1 // pred_check_branch
      %746 = sbr.rel (0) target = $region25
    $region24: #{tpu_custom_call.1} parent=1 // pred_region
      %s748 = ssub.s32 512, 512
      %749 = vsyncadd [#allocation3], %s748
      %s750 = sshll.u32 [#allocation2], 4
      %s751 = int_to_ptr.vmem [resolvable:$true] %s750
      %756 = dma.vmem_to_hbm [thread:$0]  %s751, 512, %s5, [#allocation3], 128, 128, 8
    $region25: #{tpu_custom_call.1} parent=1 // pred_fallthru
      _
    // Predicated region
    $region26: #{tpu_custom_call.1} parent=1 // pred_check
      _
    $region27: #{tpu_custom_call.1} parent=1 // pred_check_branch
      %758 = sbr.rel (0) target = $region29
    $region28: #{tpu_custom_call.1} parent=1 // pred_region
      %759 = dma.done [#allocation3], 512
    $region29: #{tpu_custom_call.1} parent=1 // pred_fallthru
      _
    %760 = vsyncpa [#allocation3], 1

</llo_original>
